<compile_context>
chip_gen: v5e
topology: v5e:2x2
jax: 0.10.0
libtpu: 0.0.40
codegen_flags: <defaults>
</compile_context>

<pallas_src>
import functools

import jax
import jax.numpy as jnp
from jax.experimental import pallas as pl
from jax.experimental.pallas import tpu as pltpu

_LANE = 128


def _const_accel_kernel(s_ref, out_ref, *, dt):
    """s_ref: (7, tile_B) = features [2..8] of the last step, batch on lanes.

    out_ref: (4, tile_B) = [x_center_plus, y_center_plus, x_vel, y_vel].
    """
    s = s_ref[...].astype(jnp.float32)   # one full-tile load; compute in f32

    pos = s[0:2, :]   # rows 0,1 -> x_center, y_center  (orig cols 2,3)
    vel = s[3:5, :]   # rows 3,4 -> x_vel,    y_vel     (orig cols 5,6)
    acc = s[5:7, :]   # rows 5,6 -> x_acc,    y_acc     (orig cols 7,8)

    pos_plus = pos + dt * vel + 0.5 * acc * acc          # (2, tile_B)

    out = jnp.concatenate([pos_plus, vel], axis=0)       # (4, tile_B)
    out_ref[...] = out.astype(out_ref.dtype)             # single lane-dense store


def constant_acceleration_forward(x, dt=1.0, tile_b=1024):
    """Pallas equivalent of ConstantAccelerationModel(dt).forward(x)."""
    B, T, F = x.shape
    assert F >= 9, "need at least 9 state features"

    # Only the last time step, only the 7 touched features, batch on lanes.
    state_t = jnp.transpose(x[:, -1, 2:9])               # (7, B)

    # 128-aligned batch tiles: every block is full & lane-dense.
    tb_req = max(_LANE, (int(tile_b) // _LANE) * _LANE)
    b_up = ((B + _LANE - 1) // _LANE) * _LANE
    tb = min(tb_req, b_up)
    grid_b = pl.cdiv(B, tb)
    b_pad = grid_b * tb
    if b_pad != B:
        state_t = jnp.pad(state_t, ((0, 0), (0, b_pad - B)))

    kernel = functools.partial(_const_accel_kernel, dt=float(dt))
    out_t = pl.pallas_call(
        kernel,
        out_shape=jax.ShapeDtypeStruct((4, b_pad), x.dtype),
        grid_spec=pltpu.PrefetchScalarGridSpec(
            num_scalar_prefetch=0,
            grid=(grid_b,),
            in_specs=[pl.BlockSpec((7, tb), lambda i: (0, i))],
            out_specs=pl.BlockSpec((4, tb), lambda i: (0, i)),
        ),
        compiler_params=pltpu.CompilerParams(
            dimension_semantics=("parallel",)),
    )(state_t)

    return jnp.transpose(out_t[:, :B])                   # (B, 4)


def _reference(x, dt=1.0):
    """Pure-JAX reference of the same semantics."""
    last = x[:, -1, :].astype(jnp.float32)
    x_center, y_center = last[:, 2], last[:, 3]
    x_vel, y_vel = last[:, 5], last[:, 6]
    x_acc, y_acc = last[:, 7], last[:, 8]
    x_center_plus = x_center + dt * x_vel + 0.5 * x_acc**2
    y_center_plus = y_center + dt * y_vel + 0.5 * y_acc**2
    return jnp.stack([x_center_plus, y_center_plus, x_vel, y_vel],
                     axis=1).astype(x.dtype)


if __name__ == "__main__":
    key = jax.random.PRNGKey(0)
    k_small, k_big = jax.random.split(key)

    # Small case matching the module's (batch, seq, feature) convention.
    B, T, F = 2, 8, 9
    x = jax.random.normal(k_small, (B, T, F), dtype=jnp.float32)
    out = jax.block_until_ready(constant_acceleration_forward(x, dt=1.0))
    ref = _reference(x, dt=1.0)
    assert out.shape == (B, 4), out.shape
    assert jnp.allclose(out, ref, atol=1e-5, rtol=1e-5), (out, ref)

    # Larger batch to exercise the multi-tile grid + lane-padding path.
    B2, T2 = 2500, 4
    x2 = jax.random.normal(k_big, (B2, T2, F), dtype=jnp.float32)
    out2 = jax.block_until_ready(
        constant_acceleration_forward(x2, dt=0.1, tile_b=1024))
    ref2 = _reference(x2, dt=0.1)
    assert out2.shape == (B2, 4), out2.shape
    assert jnp.allclose(out2, ref2, atol=1e-5, rtol=1e-5)

    print("KERNEL_OK")
</pallas_src>

<mosaic_0001>
module attributes {stable_mosaic.version = 11 : i64} {
  func.func @_const_accel_kernel(%arg0: i32, %arg1: memref<7x128xf32, #tpu.memory_space<vmem>>, %arg2: memref<4x128xf32, #tpu.memory_space<vmem>>) attributes {dimension_semantics = [#tpu.dimension_semantics<parallel>], iteration_bounds = array<i64: 1>, scalar_prefetch = 0 : i64, scratch_operands = 0 : i64, tpu.core_type = #tpu.core_type<tc>, window_params = [{transform_indices = @transform_0, window_bounds = array<i64: 7, 128>}, {transform_indices = @transform_1, window_bounds = array<i64: 4, 128>}]} {
    %c0 = arith.constant 0 : index
    %c0_0 = arith.constant 0 : index
    %0 = vector.load %arg1[%c0, %c0_0] : memref<7x128xf32, #tpu.memory_space<vmem>>, vector<7x128xf32>
    %1 = vector.extract_strided_slice %0 {offsets = [0, 0], sizes = [2, 128], strides = [1, 1]} : vector<7x128xf32> to vector<2x128xf32>
    %2 = vector.extract_strided_slice %0 {offsets = [3, 0], sizes = [2, 128], strides = [1, 1]} : vector<7x128xf32> to vector<2x128xf32>
    %3 = vector.extract_strided_slice %0 {offsets = [5, 0], sizes = [2, 128], strides = [1, 1]} : vector<7x128xf32> to vector<2x128xf32>
    %cst = arith.constant 1.000000e+00 : f32
    %4 = vector.broadcast %cst : f32 to vector<2x128xf32>
    %5 = arith.mulf %4, %2 : vector<2x128xf32>
    %6 = arith.addf %1, %5 : vector<2x128xf32>
    %cst_1 = arith.constant 5.000000e-01 : f32
    %7 = vector.broadcast %cst_1 : f32 to vector<2x128xf32>
    %8 = arith.mulf %7, %3 : vector<2x128xf32>
    %9 = arith.mulf %8, %3 : vector<2x128xf32>
    %10 = arith.addf %6, %9 : vector<2x128xf32>
    %11 = tpu.concatenate %10, %2 in 0 : vector<2x128xf32>, vector<2x128xf32> -> vector<4x128xf32>
    %c0_2 = arith.constant 0 : index
    %c0_3 = arith.constant 0 : index
    %12 = vector.load %arg2[%c0_2, %c0_3] : memref<4x128xf32, #tpu.memory_space<vmem>>, vector<4x128xf32>
    tpu.vector_store %arg2[%c0_2, %c0_3], %11 {strides = array<i32>} : memref<4x128xf32, #tpu.memory_space<vmem>>, vector<4x128xf32>,
    return
  }
  func.func @transform_0(%arg0: i32) -> (i32, i32) {
    %c0_i32 = arith.constant 0 : i32
    %c0_i32_0 = arith.constant 0 : i32
    return %c0_i32, %arg0 : i32, i32
  }
  func.func @transform_1(%arg0: i32) -> (i32, i32) {
    %c0_i32 = arith.constant 0 : i32
    %c0_i32_0 = arith.constant 0 : i32
    return %c0_i32, %arg0 : i32, i32
  }
}

</mosaic_0001>

<llo_original>
// kernel: tpu_custom_call.1
$region0: #{tpu_custom_call.1}
  #allocation0 [shape = 'u32[]', space=smem, size = 0x4, offset = 0x4, fixed_abs, tag = 'smem constant byte address 0x4 - core index']
  #allocation1 [shape = 'u32[72,128]{1,0:T(1,128)}', space=vmem, size = 0x9000, scoped, tag = 'internal scratch']
  %s0 = inlined_call_operand.hbm [shape: f32[7,128], index: 0, kind: input, shape index: {}]
  %s1 = inlined_call_operand.hbm [shape: f32[4,128], index: 1, kind: output, shape index: {}]
  %s2 = sld [smem:[#allocation0]]
  $region18: #{tpu_custom_call.1} parent=0
    _
  %s4 = ssub.s32 1, %s2
  %s5 = scalar_select 0, %s4, %s2
  $region1: #{tpu_custom_call.1} parent=0
    #allocation2 [shape = 'u8[4096]{0}', space=vmem, size = 0x1000, scoped, tag = 'input window, operand 0, single buffered']
    #allocation3 [shape = 's32[1]{0}', space=sflag, size = 0x4, scoped, tag = 'scoped memory for tpu_custom_call.1']
    #allocation4 [shape = 's32[1]{0}', space=sflag, size = 0x4, scoped, tag = 'scoped memory for tpu_custom_call.1']
    #allocation5 [shape = 'u8[2048]{0}', space=vmem, size = 0x800, scoped, tag = 'output window, operand 0, single buffered']
    %6 = vsyncpa [#allocation3], 0
    %7 = vsyncpa [#allocation4], 0
    // Predicated region
    $region2: #{tpu_custom_call.1} parent=1 // pred_check
      _
    $region3: #{tpu_custom_call.1} parent=1 // pred_check_branch
      %9 = sbr.rel (0) target = $region5
    $region4: #{tpu_custom_call.1} parent=1 // pred_region
      %11 = vsyncadd [#allocation3], 0
      %s13 = sshll.u32 %s0, 4
      %s14 = int_to_ptr.hbm [resolvable:$true] %s13
      %s15 = sshll.u32 [#allocation2], 4
      %s16 = int_to_ptr.vmem [resolvable:$true] %s15
      %18 = dma.hbm_to_vmem [thread:$0]  %s14, 128, %s16, [#allocation3]
    $region5: #{tpu_custom_call.1} parent=1 // pred_fallthru
      _
    // Predicated region
    $region6: #{tpu_custom_call.1} parent=1 // pred_check
      _
    $region7: #{tpu_custom_call.1} parent=1 // pred_check_branch
      %20 = sbr.rel (0) target = $region9
    $region8: #{tpu_custom_call.1} parent=1 // pred_region
      %22 = dma.done [#allocation3], 128
    $region9: #{tpu_custom_call.1} parent=1 // pred_fallthru
      _
    %v23 = vld [vmem:[#allocation2] sm:$0x7f]
    %v25 = vrot.slane %v23, 3
    %v27 = vadd.f32 %v23, %v25
    %v28 = vmul.f32 %v23, 0.5
    %v29 = vmul.f32 %v28, %v23
    %v31 = vrot.slane %v29, 5
    %v33 = vadd.f32 %v27, %v31
    %v34 = vrot.slane %v23, 1
    %vm36 = vcmask 1041408
    %v37 = vsel %vm36, %v33, %v34
    %38 = vst [vmem:[#allocation5] sm:$0xf] %v37
    // Predicated region
    $region10: #{tpu_custom_call.1} parent=1 // pred_check
      _
    $region11: #{tpu_custom_call.1} parent=1 // pred_check_branch
      %40 = sbr.rel (0) target = $region13
    $region12: #{tpu_custom_call.1} parent=1 // pred_region
      %42 = vsyncadd [#allocation4], 0
      %s44 = sshll.u32 [#allocation5], 4
      %s45 = int_to_ptr.vmem [resolvable:$true] %s44
      %s46 = sshll.u32 %s1, 4
      %s47 = int_to_ptr.hbm [resolvable:$true] %s46
      %49 = dma.vmem_to_hbm [thread:$0]  %s45, 64, %s47, [#allocation4]
    $region13: #{tpu_custom_call.1} parent=1 // pred_fallthru
      _
    // Predicated region
    $region14: #{tpu_custom_call.1} parent=1 // pred_check
      _
    $region15: #{tpu_custom_call.1} parent=1 // pred_check_branch
      %51 = sbr.rel (0) target = $region17
    $region16: #{tpu_custom_call.1} parent=1 // pred_region
      %53 = dma.done [#allocation4], 64
    $region17: #{tpu_custom_call.1} parent=1 // pred_fallthru
      _
    %54 = vsyncpa [#allocation3], 1
    %55 = vsyncpa [#allocation4], 1

</llo_original>
